<compile_context>
chip_gen: v6e
topology: v6e:2x2x1
jax: 0.10.0
libtpu: 0.0.40
codegen_flags: <defaults>
</compile_context>

<pallas_src>
import functools
import numpy as np
import jax
import jax.numpy as jnp
from jax import lax
from jax.experimental import pallas as pl
from jax.experimental.pallas import tpu as pltpu


# -----------------------------------------------------------------------------
# Kernel 1: depthwise conv (VALID) + pointwise 1x1 conv (one MXU matmul) + ReLU
#           + fused per-image BatchNorm partial statistics.
# grid = (N,): one image per step.
# -----------------------------------------------------------------------------
def _sepconv_kernel(x_ref, wdw_ref, wpwT_ref, bias_ref, mask_ref,
                    o_ref, sum_ref, ssq_ref, xpad_ref,
                    *, KH, KW, W, HO, WO):
    # x_ref   : (C_mid, H*W)       one image; channels in sublanes, pixels in lanes
    # wdw_ref : (KH*KW, C_mid, 1)  depthwise weights, tap-major
    # wpwT_ref: (C_out, C_mid)     pointwise 1x1 weights (transposed)
    # bias_ref: (C_out, 1)         folded bias = wpw @ b_dw (+ b_pw if no BN)
    # mask_ref: (1, H*W)           1.0 on valid output pixels, 0.0 elsewhere
    # o_ref   : (C_out, HO*WO)     compacted conv+ReLU output (lane-dense)
    # sum_ref : (C_out, 1)         per-image  sum(y)    (BN partial stats)
    # ssq_ref : (C_out, 1)         per-image  sum(y*y)  (BN partial stats)
    # xpad_ref: (C_mid, H*W+PAD)   VMEM scratch with zeroed tail so every tap is a
    #                              full-length, in-bounds lane slice.
    C_mid, HW = x_ref.shape
    PAD = xpad_ref.shape[1] - HW

    # Stage the image into the padded scratch (avoids a wrapper-side jnp.pad HBM copy).
    xpad_ref[:, :HW] = x_ref[...].astype(jnp.float32)
    if PAD > 0:
        xpad_ref[:, HW:] = jnp.zeros((C_mid, PAD), jnp.float32)

    # Depthwise conv: KH*KW shifted multiply-accumulates on the VPU over the whole
    # flattened image.  Garbage only lands on invalid (h>=HO or w>=WO) columns.
    mid = jnp.zeros((C_mid, HW), jnp.float32)
    for kh in range(KH):
        for kw in range(KW):
            t = kh * KW + kw
            d = kh * W + kw
            w_t = wdw_ref[t]                      # (C_mid, 1), one vreg, already f32
            mid = mid + xpad_ref[:, d:d + HW] * w_t

    # Pointwise 1x1 conv: ONE MXU matmul with a lane-dense (C_out, H*W) result.
    out = jnp.dot(wpwT_ref[...], mid, preferred_element_type=jnp.float32)
    out = out + bias_ref[...]
    act = jnp.maximum(out, 0.0)                   # ReLU

    # Fused BatchNorm partial statistics over the valid pixels of this image.
    masked = act * mask_ref[...]
    sum_ref[...] = jnp.sum(masked, axis=1, keepdims=True)
    ssq_ref[...] = jnp.sum(masked * masked, axis=1, keepdims=True)

    # Compact the valid (HO, WO) window to (C_out, HO*WO): cheap in-VMEM lane
    # shuffles instead of an extra XLA slice pass over HBM.
    for h in range(HO):
        o_ref[:, h * WO:(h + 1) * WO] = act[:, h * W:h * W + WO].astype(o_ref.dtype)


# -----------------------------------------------------------------------------
# Kernel 2: BatchNorm apply (scale/shift with precomputed batch statistics),
# tiled per image and pipelined over N.
# -----------------------------------------------------------------------------
def _bn_apply_kernel(y_ref, scale_ref, shift_ref, o_ref):
    # y_ref/o_ref: (C_out, S); scale/shift: (C_out, 1)
    o_ref[...] = (y_ref[...] * scale_ref[...] + shift_ref[...]).astype(o_ref.dtype)


# -----------------------------------------------------------------------------
# Parameter init (matches the shapes nn.Conv2d / nn.BatchNorm2d use)
# -----------------------------------------------------------------------------
def init_sepconv_params(key, in_channels, out_channels, kernel_size,
                        depth_multiplier=1, with_bn=True):
    KH, KW = ((kernel_size, kernel_size) if isinstance(kernel_size, int)
              else tuple(kernel_size))
    c_mid = in_channels * depth_multiplier
    k1, k2, k3, k4 = jax.random.split(key, 4)
    fan1 = KH * KW  # depthwise conv: 1 input channel per group
    wdw = jax.random.uniform(k1, (c_mid, 1, KH, KW), jnp.float32, -1.0, 1.0) / np.sqrt(fan1)
    bdw = jax.random.uniform(k2, (c_mid,), jnp.float32, -1.0, 1.0) / np.sqrt(fan1)
    wpw = jax.random.uniform(k3, (out_channels, c_mid, 1, 1), jnp.float32, -1.0, 1.0) / np.sqrt(c_mid)
    params = dict(wdw=wdw, bdw=bdw, wpw=wpw)
    if with_bn:
        params["gamma"] = jnp.ones((out_channels,), jnp.float32)
        params["beta"] = jnp.zeros((out_channels,), jnp.float32)
    else:  # pointwise conv has a bias iff there is no BN
        params["bpw"] = jax.random.uniform(k4, (out_channels,), jnp.float32, -1.0, 1.0) / np.sqrt(c_mid)
    return params


# -----------------------------------------------------------------------------
# Forward wrapper (only free reshapes + tiny scalar glue; no HBM transposes)
# -----------------------------------------------------------------------------
def sep_conv_forward(x_nchw, params, *, kernel_size, depth_multiplier=1,
                     with_bn=True, bn_eps=1e-5):
    KH, KW = ((kernel_size, kernel_size) if isinstance(kernel_size, int)
              else tuple(kernel_size))
    N, C_in, H, W = x_nchw.shape
    dm = depth_multiplier
    C_mid = C_in * dm
    C_out = params["wpw"].shape[0]
    HO, WO = H - KH + 1, W - KW + 1
    HW, S = H * W, HO * WO
    PAD = (KH - 1) * W + (KW - 1)
    VMEM_LIMIT = 48 * 1024 * 1024   # headroom for larger, double-buffered blocks

    # NCHW is already the layout the kernel wants (channels -> sublane,
    # flattened spatial -> lane): a free reshape, no transpose pass.
    x_flat = x_nchw.reshape(N, C_in, HW).astype(jnp.float32)
    if dm > 1:
        # TODO(synk): replicate channels inside the kernel instead of writing a
        # dm-times-larger activation to HBM.
        x_flat = jnp.repeat(x_flat, dm, axis=1)

    # Weight re-layouts and bias folding (tiny, done once).
    wdw_k = jnp.transpose(params["wdw"].reshape(C_mid, KH * KW), (1, 0)) \
               .reshape(KH * KW, C_mid, 1)
    wpwT_k = params["wpw"].reshape(C_out, C_mid)
    bpw = params.get("bpw")
    bpw_k = jnp.zeros((C_out, 1), jnp.float32) if bpw is None else bpw.reshape(C_out, 1)
    bias_k = wpwT_k @ params["bdw"].reshape(C_mid, 1) + bpw_k   # (C_out, 1)

    # Static 0/1 mask of valid output pixels inside the full H*W plane.
    mask_np = np.zeros((H, W), np.float32)
    mask_np[:HO, :WO] = 1.0
    valid_mask = jnp.asarray(mask_np.reshape(1, HW))

    # TODO(synk): for large H*W, tile each image into row slabs with a (KH-1)-row
    # halo (re-derive the slab size for v7x's 64 MiB VMEM vs 128 MiB on v5e/v6e).
    kernel = functools.partial(_sepconv_kernel, KH=KH, KW=KW, W=W, HO=HO, WO=WO)
    y, psum, pssq = pl.pallas_call(
        kernel,
        out_shape=(jax.ShapeDtypeStruct((N, C_out, S), jnp.float32),
                   jax.ShapeDtypeStruct((N, C_out, 1), jnp.float32),
                   jax.ShapeDtypeStruct((N, C_out, 1), jnp.float32)),
        grid_spec=pltpu.PrefetchScalarGridSpec(
            num_scalar_prefetch=0,
            grid=(N,),
            in_specs=[
                pl.BlockSpec((None, C_mid, HW), lambda n: (n, 0, 0)),       # x
                pl.BlockSpec((KH * KW, C_mid, 1), lambda n: (0, 0, 0)),     # depthwise w
                pl.BlockSpec((C_out, C_mid), lambda n: (0, 0)),             # pointwise w^T
                pl.BlockSpec((C_out, 1), lambda n: (0, 0)),                 # folded bias
                pl.BlockSpec((1, HW), lambda n: (0, 0)),                    # valid mask
            ],
            out_specs=(
                pl.BlockSpec((None, C_out, S), lambda n: (n, 0, 0)),
                pl.BlockSpec((None, C_out, 1), lambda n: (n, 0, 0)),
                pl.BlockSpec((None, C_out, 1), lambda n: (n, 0, 0)),
            ),
            scratch_shapes=[pltpu.VMEM((C_mid, HW + PAD), jnp.float32)],
        ),
        compiler_params=pltpu.CompilerParams(
            dimension_semantics=("parallel",),
            vmem_limit_bytes=VMEM_LIMIT),
    )(x_flat, wdw_k, wpwT_k, bias_k, valid_mask)

    if with_bn:
        # Finish BN statistics on (C_out, 1)-sized vectors (negligible work),
        # then apply scale/shift with a per-image-tiled, pipelined pass.
        M = N * S
        mean = jnp.sum(psum, axis=0) / M                       # (C_out, 1)
        ex2 = jnp.sum(pssq, axis=0) / M
        var = jnp.maximum(ex2 - mean * mean, 0.0)              # biased batch variance
        inv = lax.rsqrt(var + bn_eps)
        scale = params["gamma"].reshape(C_out, 1) * inv
        shift = params["beta"].reshape(C_out, 1) - mean * scale
        y = pl.pallas_call(
            _bn_apply_kernel,
            out_shape=jax.ShapeDtypeStruct((N, C_out, S), jnp.float32),
            grid=(N,),
            in_specs=[pl.BlockSpec((None, C_out, S), lambda n: (n, 0, 0)),
                      pl.BlockSpec((C_out, 1), lambda n: (0, 0)),
                      pl.BlockSpec((C_out, 1), lambda n: (0, 0))],
            out_specs=pl.BlockSpec((None, C_out, S), lambda n: (n, 0, 0)),
            compiler_params=pltpu.CompilerParams(
                dimension_semantics=("parallel",),
                vmem_limit_bytes=VMEM_LIMIT),
        )(y, scale, shift)

    # (N, C_out, HO*WO) -> NCHW: a free reshape, no transpose pass.
    return y.reshape(N, C_out, HO, WO)


# -----------------------------------------------------------------------------
# Pure-JAX reference (mirrors the PyTorch forward in training mode)
# -----------------------------------------------------------------------------
def sep_conv_reference(x_nchw, params, *, kernel_size, depth_multiplier=1,
                       with_bn=True, bn_eps=1e-5):
    C_in = x_nchw.shape[1]
    y = lax.conv_general_dilated(x_nchw, params["wdw"], (1, 1), "VALID",
                                 dimension_numbers=("NCHW", "OIHW", "NCHW"),
                                 feature_group_count=C_in)
    y = y + params["bdw"].reshape(1, -1, 1, 1)
    y = lax.conv_general_dilated(y, params["wpw"], (1, 1), "VALID",
                                 dimension_numbers=("NCHW", "OIHW", "NCHW"))
    if "bpw" in params:
        y = y + params["bpw"].reshape(1, -1, 1, 1)
    y = jnp.maximum(y, 0.0)
    if with_bn:
        mean = jnp.mean(y, axis=(0, 2, 3), keepdims=True)
        var = jnp.mean((y - mean) ** 2, axis=(0, 2, 3), keepdims=True)
        y = (y - mean) * lax.rsqrt(var + bn_eps)
        y = y * params["gamma"].reshape(1, -1, 1, 1) + params["beta"].reshape(1, -1, 1, 1)
    return y


if __name__ == "__main__":
    key = jax.random.PRNGKey(0)
    kx, kp = jax.random.split(key)

    N, C_in, H, W = 2, 4, 16, 16
    C_out, ksz, dm = 8, 3, 1

    x = jax.random.normal(kx, (N, C_in, H, W), jnp.float32)
    params = init_sepconv_params(kp, C_in, C_out, ksz, depth_multiplier=dm, with_bn=True)

    out = sep_conv_forward(x, params, kernel_size=ksz, depth_multiplier=dm, with_bn=True)
    out = jax.block_until_ready(out)

    ref = sep_conv_reference(x, params, kernel_size=ksz, depth_multiplier=dm, with_bn=True)
    assert out.shape == (N, C_out, H - ksz + 1, W - ksz + 1), out.shape
    np.testing.assert_allclose(np.asarray(out), np.asarray(ref), atol=5e-4, rtol=5e-4)

    print("KERNEL_OK")
</pallas_src>

<mosaic_0001>
module attributes {stable_mosaic.version = 11 : i64} {
  func.func @_sepconv_kernel(%arg0: i32, %arg1: memref<1x4x256xf32, #tpu.memory_space<vmem>>, %arg2: memref<9x4x1xf32, #tpu.memory_space<vmem>>, %arg3: memref<8x4xf32, #tpu.memory_space<vmem>>, %arg4: memref<8x1xf32, #tpu.memory_space<vmem>>, %arg5: memref<1x256xf32, #tpu.memory_space<vmem>>, %arg6: memref<1x8x196xf32, #tpu.memory_space<vmem>>, %arg7: memref<1x8x1xf32, #tpu.memory_space<vmem>>, %arg8: memref<1x8x1xf32, #tpu.memory_space<vmem>>, %arg9: memref<4x290xf32, #tpu.memory_space<vmem>>) attributes {dimension_semantics = [#tpu.dimension_semantics<parallel>], iteration_bounds = array<i64: 2>, scalar_prefetch = 0 : i64, scratch_operands = 1 : i64, tpu.core_type = #tpu.core_type<tc>, window_params = [{transform_indices = @transform_0, window_bounds = array<i64: 1, 4, 256>}, {pipeline_mode = #tpu.pipeline_mode<synchronous>, transform_indices = @transform_1, window_bounds = array<i64: 9, 4, 1>}, {pipeline_mode = #tpu.pipeline_mode<synchronous>, transform_indices = @transform_2, window_bounds = array<i64: 8, 4>}, {pipeline_mode = #tpu.pipeline_mode<synchronous>, transform_indices = @transform_3, window_bounds = array<i64: 8, 1>}, {pipeline_mode = #tpu.pipeline_mode<synchronous>, transform_indices = @transform_4, window_bounds = array<i64: 1, 256>}, {transform_indices = @transform_5, window_bounds = array<i64: 1, 8, 196>}, {transform_indices = @transform_6, window_bounds = array<i64: 1, 8, 1>}, {transform_indices = @transform_7, window_bounds = array<i64: 1, 8, 1>}]} {
    %c0 = arith.constant 0 : index
    %c0_0 = arith.constant 0 : index
    %c0_1 = arith.constant 0 : index
    %0 = vector.load %arg1[%c0, %c0_0, %c0_1] : memref<1x4x256xf32, #tpu.memory_space<vmem>>, vector<1x4x256xf32>
    %1 = vector.shape_cast %0 : vector<1x4x256xf32> to vector<4x256xf32>
    %c0_2 = arith.constant 0 : index
    %c0_3 = arith.constant 0 : index
    %2 = vector.load %arg9[%c0_2, %c0_3] : memref<4x290xf32, #tpu.memory_space<vmem>>, vector<4x256xf32>
    tpu.vector_store %arg9[%c0_2, %c0_3], %1 {strides = array<i32>} : memref<4x290xf32, #tpu.memory_space<vmem>>, vector<4x256xf32>,
    %cst = arith.constant 0.000000e+00 : f32
    %3 = vector.broadcast %cst : f32 to vector<4x34xf32>
    %c0_4 = arith.constant 0 : index
    %c256 = arith.constant 256 : index
    %4 = vector.load %arg9[%c0_4, %c256] : memref<4x290xf32, #tpu.memory_space<vmem>>, vector<4x34xf32>
    tpu.vector_store %arg9[%c0_4, %c256], %3 {strides = array<i32>} : memref<4x290xf32, #tpu.memory_space<vmem>>, vector<4x34xf32>,
    %cst_5 = arith.constant 0.000000e+00 : f32
    %5 = vector.broadcast %cst_5 : f32 to vector<4x256xf32>
    %c0_6 = arith.constant 0 : index
    %c0_7 = arith.constant 0 : index
    %c0_8 = arith.constant 0 : index
    %6 = vector.load %arg2[%c0_6, %c0_7, %c0_8] : memref<9x4x1xf32, #tpu.memory_space<vmem>>, vector<1x4x1xf32>
    %7 = vector.shape_cast %6 : vector<1x4x1xf32> to vector<4x1xf32>
    %c0_9 = arith.constant 0 : index
    %c0_10 = arith.constant 0 : index
    %8 = vector.load %arg9[%c0_9, %c0_10] : memref<4x290xf32, #tpu.memory_space<vmem>>, vector<4x256xf32>
    %9 = vector.broadcast %7 : vector<4x1xf32> to vector<4x256xf32>
    %10 = arith.mulf %8, %9 : vector<4x256xf32>
    %11 = arith.addf %5, %10 : vector<4x256xf32>
    %c1 = arith.constant 1 : index
    %c0_11 = arith.constant 0 : index
    %c0_12 = arith.constant 0 : index
    %12 = vector.load %arg2[%c1, %c0_11, %c0_12] : memref<9x4x1xf32, #tpu.memory_space<vmem>>, vector<1x4x1xf32>
    %13 = vector.shape_cast %12 : vector<1x4x1xf32> to vector<4x1xf32>
    %c0_13 = arith.constant 0 : index
    %c1_14 = arith.constant 1 : index
    %14 = vector.load %arg9[%c0_13, %c1_14] : memref<4x290xf32, #tpu.memory_space<vmem>>, vector<4x256xf32>
    %15 = vector.broadcast %13 : vector<4x1xf32> to vector<4x256xf32>
    %16 = arith.mulf %14, %15 : vector<4x256xf32>
    %17 = arith.addf %11, %16 : vector<4x256xf32>
    %c2 = arith.constant 2 : index
    %c0_15 = arith.constant 0 : index
    %c0_16 = arith.constant 0 : index
    %18 = vector.load %arg2[%c2, %c0_15, %c0_16] : memref<9x4x1xf32, #tpu.memory_space<vmem>>, vector<1x4x1xf32>
    %19 = vector.shape_cast %18 : vector<1x4x1xf32> to vector<4x1xf32>
    %c0_17 = arith.constant 0 : index
    %c2_18 = arith.constant 2 : index
    %20 = vector.load %arg9[%c0_17, %c2_18] : memref<4x290xf32, #tpu.memory_space<vmem>>, vector<4x256xf32>
    %21 = vector.broadcast %19 : vector<4x1xf32> to vector<4x256xf32>
    %22 = arith.mulf %20, %21 : vector<4x256xf32>
    %23 = arith.addf %17, %22 : vector<4x256xf32>
    %c3 = arith.constant 3 : index
    %c0_19 = arith.constant 0 : index
    %c0_20 = arith.constant 0 : index
    %24 = vector.load %arg2[%c3, %c0_19, %c0_20] : memref<9x4x1xf32, #tpu.memory_space<vmem>>, vector<1x4x1xf32>
    %25 = vector.shape_cast %24 : vector<1x4x1xf32> to vector<4x1xf32>
    %c0_21 = arith.constant 0 : index
    %c16 = arith.constant 16 : index
    %26 = vector.load %arg9[%c0_21, %c16] : memref<4x290xf32, #tpu.memory_space<vmem>>, vector<4x256xf32>
    %27 = vector.broadcast %25 : vector<4x1xf32> to vector<4x256xf32>
    %28 = arith.mulf %26, %27 : vector<4x256xf32>
    %29 = arith.addf %23, %28 : vector<4x256xf32>
    %c4 = arith.constant 4 : index
    %c0_22 = arith.constant 0 : index
    %c0_23 = arith.constant 0 : index
    %30 = vector.load %arg2[%c4, %c0_22, %c0_23] : memref<9x4x1xf32, #tpu.memory_space<vmem>>, vector<1x4x1xf32>
    %31 = vector.shape_cast %30 : vector<1x4x1xf32> to vector<4x1xf32>
    %c0_24 = arith.constant 0 : index
    %c17 = arith.constant 17 : index
    %32 = vector.load %arg9[%c0_24, %c17] : memref<4x290xf32, #tpu.memory_space<vmem>>, vector<4x256xf32>
    %33 = vector.broadcast %31 : vector<4x1xf32> to vector<4x256xf32>
    %34 = arith.mulf %32, %33 : vector<4x256xf32>
    %35 = arith.addf %29, %34 : vector<4x256xf32>
    %c5 = arith.constant 5 : index
    %c0_25 = arith.constant 0 : index
    %c0_26 = arith.constant 0 : index
    %36 = vector.load %arg2[%c5, %c0_25, %c0_26] : memref<9x4x1xf32, #tpu.memory_space<vmem>>, vector<1x4x1xf32>
    %37 = vector.shape_cast %36 : vector<1x4x1xf32> to vector<4x1xf32>
    %c0_27 = arith.constant 0 : index
    %c18 = arith.constant 18 : index
    %38 = vector.load %arg9[%c0_27, %c18] : memref<4x290xf32, #tpu.memory_space<vmem>>, vector<4x256xf32>
    %39 = vector.broadcast %37 : vector<4x1xf32> to vector<4x256xf32>
    %40 = arith.mulf %38, %39 : vector<4x256xf32>
    %41 = arith.addf %35, %40 : vector<4x256xf32>
    %c6 = arith.constant 6 : index
    %c0_28 = arith.constant 0 : index
    %c0_29 = arith.constant 0 : index
    %42 = vector.load %arg2[%c6, %c0_28, %c0_29] : memref<9x4x1xf32, #tpu.memory_space<vmem>>, vector<1x4x1xf32>
    %43 = vector.shape_cast %42 : vector<1x4x1xf32> to vector<4x1xf32>
    %c0_30 = arith.constant 0 : index
    %c32 = arith.constant 32 : index
    %44 = vector.load %arg9[%c0_30, %c32] : memref<4x290xf32, #tpu.memory_space<vmem>>, vector<4x256xf32>
    %45 = vector.broadcast %43 : vector<4x1xf32> to vector<4x256xf32>
    %46 = arith.mulf %44, %45 : vector<4x256xf32>
    %47 = arith.addf %41, %46 : vector<4x256xf32>
    %c7 = arith.constant 7 : index
    %c0_31 = arith.constant 0 : index
    %c0_32 = arith.constant 0 : index
    %48 = vector.load %arg2[%c7, %c0_31, %c0_32] : memref<9x4x1xf32, #tpu.memory_space<vmem>>, vector<1x4x1xf32>
    %49 = vector.shape_cast %48 : vector<1x4x1xf32> to vector<4x1xf32>
    %c0_33 = arith.constant 0 : index
    %c33 = arith.constant 33 : index
    %50 = vector.load %arg9[%c0_33, %c33] : memref<4x290xf32, #tpu.memory_space<vmem>>, vector<4x256xf32>
    %51 = vector.broadcast %49 : vector<4x1xf32> to vector<4x256xf32>
    %52 = arith.mulf %50, %51 : vector<4x256xf32>
    %53 = arith.addf %47, %52 : vector<4x256xf32>
    %c8 = arith.constant 8 : index
    %c0_34 = arith.constant 0 : index
    %c0_35 = arith.constant 0 : index
    %54 = vector.load %arg2[%c8, %c0_34, %c0_35] : memref<9x4x1xf32, #tpu.memory_space<vmem>>, vector<1x4x1xf32>
    %55 = vector.shape_cast %54 : vector<1x4x1xf32> to vector<4x1xf32>
    %c0_36 = arith.constant 0 : index
    %c34 = arith.constant 34 : index
    %56 = vector.load %arg9[%c0_36, %c34] : memref<4x290xf32, #tpu.memory_space<vmem>>, vector<4x256xf32>
    %57 = vector.broadcast %55 : vector<4x1xf32> to vector<4x256xf32>
    %58 = arith.mulf %56, %57 : vector<4x256xf32>
    %59 = arith.addf %53, %58 : vector<4x256xf32>
    %c0_37 = arith.constant 0 : index
    %c0_38 = arith.constant 0 : index
    %60 = vector.load %arg3[%c0_37, %c0_38] : memref<8x4xf32, #tpu.memory_space<vmem>>, vector<8x4xf32>
    %cst_39 = arith.constant dense<0.000000e+00> : vector<8x256xf32>
    %61 = tpu.matmul %60, %59, %cst_39 {dimension_numbers = #tpu.dot_dimension_numbers<[1], [0], [0], [1], [0, 0, 1, 1], [], []>} : vector<8x4xf32>, vector<4x256xf32>, vector<8x256xf32> -> vector<8x256xf32>
    %c0_40 = arith.constant 0 : index
    %c0_41 = arith.constant 0 : index
    %62 = vector.load %arg4[%c0_40, %c0_41] : memref<8x1xf32, #tpu.memory_space<vmem>>, vector<8x1xf32>
    %63 = vector.broadcast %62 : vector<8x1xf32> to vector<8x256xf32>
    %64 = arith.addf %61, %63 : vector<8x256xf32>
    %cst_42 = arith.constant 0.000000e+00 : f32
    %65 = vector.broadcast %cst_42 : f32 to vector<8x256xf32>
    %66 = arith.maximumf %64, %65 : vector<8x256xf32>
    %c0_43 = arith.constant 0 : index
    %c0_44 = arith.constant 0 : index
    %67 = vector.load %arg5[%c0_43, %c0_44] : memref<1x256xf32, #tpu.memory_space<vmem>>, vector<1x256xf32>
    %68 = vector.broadcast %67 : vector<1x256xf32> to vector<8x256xf32>
    %69 = arith.mulf %66, %68 : vector<8x256xf32>
    %cst_45 = arith.constant dense<0.000000e+00> : vector<8xf32>
    %70 = vector.multi_reduction <add>, %69, %cst_45 [1] : vector<8x256xf32> to vector<8xf32>
    %71 = vector.shape_cast %70 : vector<8xf32> to vector<8x1xf32>
    %c0_46 = arith.constant 0 : index
    %c0_47 = arith.constant 0 : index
    %c0_48 = arith.constant 0 : index
    %72 = vector.load %arg7[%c0_46, %c0_47, %c0_48] : memref<1x8x1xf32, #tpu.memory_space<vmem>>, vector<1x8x1xf32>
    %73 = vector.shape_cast %72 : vector<1x8x1xf32> to vector<8x1xf32>
    %74 = vector.shape_cast %71 : vector<8x1xf32> to vector<1x8x1xf32>
    tpu.vector_store %arg7[%c0_46, %c0_47, %c0_48], %74 {strides = array<i32>} : memref<1x8x1xf32, #tpu.memory_space<vmem>>, vector<1x8x1xf32>,
    %75 = arith.mulf %69, %69 : vector<8x256xf32>
    %cst_49 = arith.constant dense<0.000000e+00> : vector<8xf32>
    %76 = vector.multi_reduction <add>, %75, %cst_49 [1] : vector<8x256xf32> to vector<8xf32>
    %77 = vector.shape_cast %76 : vector<8xf32> to vector<8x1xf32>
    %c0_50 = arith.constant 0 : index
    %c0_51 = arith.constant 0 : index
    %c0_52 = arith.constant 0 : index
    %78 = vector.load %arg8[%c0_50, %c0_51, %c0_52] : memref<1x8x1xf32, #tpu.memory_space<vmem>>, vector<1x8x1xf32>
    %79 = vector.shape_cast %78 : vector<1x8x1xf32> to vector<8x1xf32>
    %80 = vector.shape_cast %77 : vector<8x1xf32> to vector<1x8x1xf32>
    tpu.vector_store %arg8[%c0_50, %c0_51, %c0_52], %80 {strides = array<i32>} : memref<1x8x1xf32, #tpu.memory_space<vmem>>, vector<1x8x1xf32>,
    %81 = vector.extract_strided_slice %66 {offsets = [0, 0], sizes = [8, 14], strides = [1, 1]} : vector<8x256xf32> to vector<8x14xf32>
    %c0_53 = arith.constant 0 : index
    %c0_54 = arith.constant 0 : index
    %c0_55 = arith.constant 0 : index
    %82 = vector.load %arg6[%c0_53, %c0_54, %c0_55] : memref<1x8x196xf32, #tpu.memory_space<vmem>>, vector<1x8x14xf32>
    %83 = vector.shape_cast %82 : vector<1x8x14xf32> to vector<8x14xf32>
    %84 = vector.shape_cast %81 : vector<8x14xf32> to vector<1x8x14xf32>
    tpu.vector_store %arg6[%c0_53, %c0_54, %c0_55], %84 {strides = array<i32>} : memref<1x8x196xf32, #tpu.memory_space<vmem>>, vector<1x8x14xf32>,
    %85 = vector.extract_strided_slice %66 {offsets = [0, 16], sizes = [8, 14], strides = [1, 1]} : vector<8x256xf32> to vector<8x14xf32>
    %c0_56 = arith.constant 0 : index
    %c0_57 = arith.constant 0 : index
    %c14 = arith.constant 14 : index
    %86 = vector.load %arg6[%c0_56, %c0_57, %c14] : memref<1x8x196xf32, #tpu.memory_space<vmem>>, vector<1x8x14xf32>
    %87 = vector.shape_cast %86 : vector<1x8x14xf32> to vector<8x14xf32>
    %88 = vector.shape_cast %85 : vector<8x14xf32> to vector<1x8x14xf32>
    tpu.vector_store %arg6[%c0_56, %c0_57, %c14], %88 {strides = array<i32>} : memref<1x8x196xf32, #tpu.memory_space<vmem>>, vector<1x8x14xf32>,
    %89 = vector.extract_strided_slice %66 {offsets = [0, 32], sizes = [8, 14], strides = [1, 1]} : vector<8x256xf32> to vector<8x14xf32>
    %c0_58 = arith.constant 0 : index
    %c0_59 = arith.constant 0 : index
    %c28 = arith.constant 28 : index
    %90 = vector.load %arg6[%c0_58, %c0_59, %c28] : memref<1x8x196xf32, #tpu.memory_space<vmem>>, vector<1x8x14xf32>
    %91 = vector.shape_cast %90 : vector<1x8x14xf32> to vector<8x14xf32>
    %92 = vector.shape_cast %89 : vector<8x14xf32> to vector<1x8x14xf32>
    tpu.vector_store %arg6[%c0_58, %c0_59, %c28], %92 {strides = array<i32>} : memref<1x8x196xf32, #tpu.memory_space<vmem>>, vector<1x8x14xf32>,
    %93 = vector.extract_strided_slice %66 {offsets = [0, 48], sizes = [8, 14], strides = [1, 1]} : vector<8x256xf32> to vector<8x14xf32>
    %c0_60 = arith.constant 0 : index
    %c0_61 = arith.constant 0 : index
    %c42 = arith.constant 42 : index
    %94 = vector.load %arg6[%c0_60, %c0_61, %c42] : memref<1x8x196xf32, #tpu.memory_space<vmem>>, vector<1x8x14xf32>
    %95 = vector.shape_cast %94 : vector<1x8x14xf32> to vector<8x14xf32>
    %96 = vector.shape_cast %93 : vector<8x14xf32> to vector<1x8x14xf32>
    tpu.vector_store %arg6[%c0_60, %c0_61, %c42], %96 {strides = array<i32>} : memref<1x8x196xf32, #tpu.memory_space<vmem>>, vector<1x8x14xf32>,
    %97 = vector.extract_strided_slice %66 {offsets = [0, 64], sizes = [8, 14], strides = [1, 1]} : vector<8x256xf32> to vector<8x14xf32>
    %c0_62 = arith.constant 0 : index
    %c0_63 = arith.constant 0 : index
    %c56 = arith.constant 56 : index
    %98 = vector.load %arg6[%c0_62, %c0_63, %c56] : memref<1x8x196xf32, #tpu.memory_space<vmem>>, vector<1x8x14xf32>
    %99 = vector.shape_cast %98 : vector<1x8x14xf32> to vector<8x14xf32>
    %100 = vector.shape_cast %97 : vector<8x14xf32> to vector<1x8x14xf32>
    tpu.vector_store %arg6[%c0_62, %c0_63, %c56], %100 {strides = array<i32>} : memref<1x8x196xf32, #tpu.memory_space<vmem>>, vector<1x8x14xf32>,
    %101 = vector.extract_strided_slice %66 {offsets = [0, 80], sizes = [8, 14], strides = [1, 1]} : vector<8x256xf32> to vector<8x14xf32>
    %c0_64 = arith.constant 0 : index
    %c0_65 = arith.constant 0 : index
    %c70 = arith.constant 70 : index
    %102 = vector.load %arg6[%c0_64, %c0_65, %c70] : memref<1x8x196xf32, #tpu.memory_space<vmem>>, vector<1x8x14xf32>
    %103 = vector.shape_cast %102 : vector<1x8x14xf32> to vector<8x14xf32>
    %104 = vector.shape_cast %101 : vector<8x14xf32> to vector<1x8x14xf32>
    tpu.vector_store %arg6[%c0_64, %c0_65, %c70], %104 {strides = array<i32>} : memref<1x8x196xf32, #tpu.memory_space<vmem>>, vector<1x8x14xf32>,
    %105 = vector.extract_strided_slice %66 {offsets = [0, 96], sizes = [8, 14], strides = [1, 1]} : vector<8x256xf32> to vector<8x14xf32>
    %c0_66 = arith.constant 0 : index
    %c0_67 = arith.constant 0 : index
    %c84 = arith.constant 84 : index
    %106 = vector.load %arg6[%c0_66, %c0_67, %c84] : memref<1x8x196xf32, #tpu.memory_space<vmem>>, vector<1x8x14xf32>
    %107 = vector.shape_cast %106 : vector<1x8x14xf32> to vector<8x14xf32>
    %108 = vector.shape_cast %105 : vector<8x14xf32> to vector<1x8x14xf32>
    tpu.vector_store %arg6[%c0_66, %c0_67, %c84], %108 {strides = array<i32>} : memref<1x8x196xf32, #tpu.memory_space<vmem>>, vector<1x8x14xf32>,
    %109 = vector.extract_strided_slice %66 {offsets = [0, 112], sizes = [8, 14], strides = [1, 1]} : vector<8x256xf32> to vector<8x14xf32>
    %c0_68 = arith.constant 0 : index
    %c0_69 = arith.constant 0 : index
    %c98 = arith.constant 98 : index
    %110 = vector.load %arg6[%c0_68, %c0_69, %c98] : memref<1x8x196xf32, #tpu.memory_space<vmem>>, vector<1x8x14xf32>
    %111 = vector.shape_cast %110 : vector<1x8x14xf32> to vector<8x14xf32>
    %112 = vector.shape_cast %109 : vector<8x14xf32> to vector<1x8x14xf32>
    tpu.vector_store %arg6[%c0_68, %c0_69, %c98], %112 {strides = array<i32>} : memref<1x8x196xf32, #tpu.memory_space<vmem>>, vector<1x8x14xf32>,
    %113 = vector.extract_strided_slice %66 {offsets = [0, 128], sizes = [8, 14], strides = [1, 1]} : vector<8x256xf32> to vector<8x14xf32>
    %c0_70 = arith.constant 0 : index
    %c0_71 = arith.constant 0 : index
    %c112 = arith.constant 112 : index
    %114 = vector.load %arg6[%c0_70, %c0_71, %c112] : memref<1x8x196xf32, #tpu.memory_space<vmem>>, vector<1x8x14xf32>
    %115 = vector.shape_cast %114 : vector<1x8x14xf32> to vector<8x14xf32>
    %116 = vector.shape_cast %113 : vector<8x14xf32> to vector<1x8x14xf32>
    tpu.vector_store %arg6[%c0_70, %c0_71, %c112], %116 {strides = array<i32>} : memref<1x8x196xf32, #tpu.memory_space<vmem>>, vector<1x8x14xf32>,
    %117 = vector.extract_strided_slice %66 {offsets = [0, 144], sizes = [8, 14], strides = [1, 1]} : vector<8x256xf32> to vector<8x14xf32>
    %c0_72 = arith.constant 0 : index
    %c0_73 = arith.constant 0 : index
    %c126 = arith.constant 126 : index
    %118 = vector.load %arg6[%c0_72, %c0_73, %c126] : memref<1x8x196xf32, #tpu.memory_space<vmem>>, vector<1x8x14xf32>
    %119 = vector.shape_cast %118 : vector<1x8x14xf32> to vector<8x14xf32>
    %120 = vector.shape_cast %117 : vector<8x14xf32> to vector<1x8x14xf32>
    tpu.vector_store %arg6[%c0_72, %c0_73, %c126], %120 {strides = array<i32>} : memref<1x8x196xf32, #tpu.memory_space<vmem>>, vector<1x8x14xf32>,
    %121 = vector.extract_strided_slice %66 {offsets = [0, 160], sizes = [8, 14], strides = [1, 1]} : vector<8x256xf32> to vector<8x14xf32>
    %c0_74 = arith.constant 0 : index
    %c0_75 = arith.constant 0 : index
    %c140 = arith.constant 140 : index
    %122 = vector.load %arg6[%c0_74, %c0_75, %c140] : memref<1x8x196xf32, #tpu.memory_space<vmem>>, vector<1x8x14xf32>
    %123 = vector.shape_cast %122 : vector<1x8x14xf32> to vector<8x14xf32>
    %124 = vector.shape_cast %121 : vector<8x14xf32> to vector<1x8x14xf32>
    tpu.vector_store %arg6[%c0_74, %c0_75, %c140], %124 {strides = array<i32>} : memref<1x8x196xf32, #tpu.memory_space<vmem>>, vector<1x8x14xf32>,
    %125 = vector.extract_strided_slice %66 {offsets = [0, 176], sizes = [8, 14], strides = [1, 1]} : vector<8x256xf32> to vector<8x14xf32>
    %c0_76 = arith.constant 0 : index
    %c0_77 = arith.constant 0 : index
    %c154 = arith.constant 154 : index
    %126 = vector.load %arg6[%c0_76, %c0_77, %c154] : memref<1x8x196xf32, #tpu.memory_space<vmem>>, vector<1x8x14xf32>
    %127 = vector.shape_cast %126 : vector<1x8x14xf32> to vector<8x14xf32>
    %128 = vector.shape_cast %125 : vector<8x14xf32> to vector<1x8x14xf32>
    tpu.vector_store %arg6[%c0_76, %c0_77, %c154], %128 {strides = array<i32>} : memref<1x8x196xf32, #tpu.memory_space<vmem>>, vector<1x8x14xf32>,
    %129 = vector.extract_strided_slice %66 {offsets = [0, 192], sizes = [8, 14], strides = [1, 1]} : vector<8x256xf32> to vector<8x14xf32>
    %c0_78 = arith.constant 0 : index
    %c0_79 = arith.constant 0 : index
    %c168 = arith.constant 168 : index
    %130 = vector.load %arg6[%c0_78, %c0_79, %c168] : memref<1x8x196xf32, #tpu.memory_space<vmem>>, vector<1x8x14xf32>
    %131 = vector.shape_cast %130 : vector<1x8x14xf32> to vector<8x14xf32>
    %132 = vector.shape_cast %129 : vector<8x14xf32> to vector<1x8x14xf32>
    tpu.vector_store %arg6[%c0_78, %c0_79, %c168], %132 {strides = array<i32>} : memref<1x8x196xf32, #tpu.memory_space<vmem>>, vector<1x8x14xf32>,
    %133 = vector.extract_strided_slice %66 {offsets = [0, 208], sizes = [8, 14], strides = [1, 1]} : vector<8x256xf32> to vector<8x14xf32>
    %c0_80 = arith.constant 0 : index
    %c0_81 = arith.constant 0 : index
    %c182 = arith.constant 182 : index
    %134 = vector.load %arg6[%c0_80, %c0_81, %c182] : memref<1x8x196xf32, #tpu.memory_space<vmem>>, vector<1x8x14xf32>
    %135 = vector.shape_cast %134 : vector<1x8x14xf32> to vector<8x14xf32>
    %136 = vector.shape_cast %133 : vector<8x14xf32> to vector<1x8x14xf32>
    tpu.vector_store %arg6[%c0_80, %c0_81, %c182], %136 {strides = array<i32>} : memref<1x8x196xf32, #tpu.memory_space<vmem>>, vector<1x8x14xf32>,
    return
  }
  func.func @transform_0(%arg0: i32) -> (i32, i32, i32) {
    %c0_i32 = arith.constant 0 : i32
    %c0_i32_0 = arith.constant 0 : i32
    %c0_i32_1 = arith.constant 0 : i32
    return %arg0, %c0_i32, %c0_i32_0 : i32, i32, i32
  }
  func.func @transform_1(%arg0: i32) -> (i32, i32, i32) {
    %c0_i32 = arith.constant 0 : i32
    %c0_i32_0 = arith.constant 0 : i32
    %c0_i32_1 = arith.constant 0 : i32
    %c0_i32_2 = arith.constant 0 : i32
    return %c0_i32, %c0_i32_0, %c0_i32_1 : i32, i32, i32
  }
  func.func @transform_2(%arg0: i32) -> (i32, i32) {
    %c0_i32 = arith.constant 0 : i32
    %c0_i32_0 = arith.constant 0 : i32
    %c0_i32_1 = arith.constant 0 : i32
    return %c0_i32, %c0_i32_0 : i32, i32
  }
  func.func @transform_3(%arg0: i32) -> (i32, i32) {
    %c0_i32 = arith.constant 0 : i32
    %c0_i32_0 = arith.constant 0 : i32
    %c0_i32_1 = arith.constant 0 : i32
    return %c0_i32, %c0_i32_0 : i32, i32
  }
  func.func @transform_4(%arg0: i32) -> (i32, i32) {
    %c0_i32 = arith.constant 0 : i32
    %c0_i32_0 = arith.constant 0 : i32
    %c0_i32_1 = arith.constant 0 : i32
    return %c0_i32, %c0_i32_0 : i32, i32
  }
  func.func @transform_5(%arg0: i32) -> (i32, i32, i32) {
    %c0_i32 = arith.constant 0 : i32
    %c0_i32_0 = arith.constant 0 : i32
    %c0_i32_1 = arith.constant 0 : i32
    return %arg0, %c0_i32, %c0_i32_0 : i32, i32, i32
  }
  func.func @transform_6(%arg0: i32) -> (i32, i32, i32) {
    %c0_i32 = arith.constant 0 : i32
    %c0_i32_0 = arith.constant 0 : i32
    %c0_i32_1 = arith.constant 0 : i32
    return %arg0, %c0_i32, %c0_i32_0 : i32, i32, i32
  }
  func.func @transform_7(%arg0: i32) -> (i32, i32, i32) {
    %c0_i32 = arith.constant 0 : i32
    %c0_i32_0 = arith.constant 0 : i32
    %c0_i32_1 = arith.constant 0 : i32
    return %arg0, %c0_i32, %c0_i32_0 : i32, i32, i32
  }
}

</mosaic_0001>

<llo_original>
// kernel: tpu_custom_call.1
$region0: #{tpu_custom_call.1}
  #allocation0 [shape = 'u32[]', space=smem, size = 0x4, offset = 0x4, fixed_abs, tag = 'smem constant byte address 0x4 - core index']
  #allocation1 [shape = 'u32[144,128]{1,0:T(1,128)}', space=vmem, size = 0x12000, scoped, tag = 'internal scratch']
  #allocation2 [shape = 'f32[4,290]{1,0:T(4,128)}', space=vmem, size = 0x1800, scoped, tag = 'scratch operand']
  %s0 = inlined_call_operand.vmem [shape: f32[2,4,256], index: 0, kind: input, shape index: {}]
  %s1 = inlined_call_operand.vmem [shape: f32[9,4,1], index: 1, kind: input, shape index: {}]
  %s2 = inlined_call_operand.vmem [shape: f32[8,4], index: 2, kind: input, shape index: {}]
  %s3 = inlined_call_operand.vmem [shape: f32[8,1], index: 3, kind: input, shape index: {}]
  %s4 = inlined_call_operand.vmem [shape: f32[1,256], index: 4, kind: input, shape index: {}]
  %s5 = inlined_call_operand.hbm [shape: f32[2,8,196], index: 5, kind: output, shape index: {0}]
  %s6 = inlined_call_operand.vmem [shape: f32[2,8,1], index: 6, kind: output, shape index: {1}]
  %s7 = inlined_call_operand.vmem [shape: f32[2,8,1], index: 7, kind: output, shape index: {2}]
  %8 = xla_tuple %s5, %s6, %s7
  %s9 = sld [smem:[#allocation0]]
  $region69: #{tpu_custom_call.1} parent=0
    _
  %s11 = ssub.s32 1, %s9
  %s12 = scalar_select 0, %s11, %s9
  $region1: #{tpu_custom_call.1} parent=0
    #allocation3 [shape = 'u8[16384]{0}', space=vmem, size = 0x4000, scoped, tag = 'output window, operand 0']
    #allocation4 [shape = 's32[2]{0}', space=sflag, size = 0x8, scoped, tag = 'scoped memory for tpu_custom_call.1']
    %13 = vsyncpa [#allocation4], 0
    %s14 = scalar_lea.sflag [#allocation4], 1
    %15 = vsyncpa %s14, 0
    loop: start=0, step=1, limit=4
    $region2: #{tpu_custom_call.1} parent=1 // loop_pre_header
      _
    $region3: #{tpu_custom_call.1} parent=1 // loop_header
      %s17 = sphi 0, %s21
      %p18 = scmp.ge.s32.totalorder %s17, 4
      %s27 = sphi 0, %s29
      %s30 = sphi 0, %s27
      %s31 = sphi 0, %s30
      %s47 = sphi 0, %s31
      %s51 = sphi 0, %s51
      %s53 = sphi 0, %s51
      %s54 = sphi 0, %s53
      %s68 = sphi 0, %s54
      %s72 = sphi 0, %s72
      %s74 = sphi 0, %s72
      %s75 = sphi 0, %s74
      %s89 = sphi 0, %s75
      %s93 = sphi 0, %s93
      %s95 = sphi 0, %s93
      %s96 = sphi 0, %s95
      %s110 = sphi 0, %s96
      %s114 = sphi 0, %s114
      %s116 = sphi 0, %s114
      %s117 = sphi 0, %s116
      %s131 = sphi 0, %s117
      %s137 = sphi 0, %s139
      %s140 = sphi 0, %s137
      %s141 = sphi 0, %s140
      %s157 = sphi 0, %s141
      %s163 = sphi 0, %s165
      %s166 = sphi 0, %s163
      %s167 = sphi 0, %s166
      %s183 = sphi 0, %s167
      %s189 = sphi 0, %s191
      %s192 = sphi 0, %s189
      %s193 = sphi 0, %s192
      %s209 = sphi 0, %s193
    $region4: #{tpu_custom_call.1} parent=1 // loop_header_branch
      %20 = sbr.rel (%p18) target = $region8
    $region5: #{tpu_custom_call.1} parent=1 // loop_body
      %s22 = ssub.s32 %s17, 1
      %s23 = ssub.s32 %s17, 2
      %s24 = sadd.s32 %s17, 1
      %s25 = ssub.s32 %s17, %s24
      %p26 = scmp.eq.s32.totalorder %s25, 0
      %s28 = sadd.s32 %s27, 1
      %s29 = scalar_select %p26, %s27, %s28
      %p32 = pneg %p26
      %p33 = scmp.eq.s32.totalorder %s17, 1
      %p34 = por %p32, %p33
      %p35 = scmp.ne.s32.totalorder %s27, %s30
      %p36 = scmp.eq.s32.totalorder %s17, 0
      %p37 = por %p35, %p36
      %p38 = scmp.ne.s32.totalorder %s27, %s30
      %p39 = scmp.eq.s32.totalorder %s22, 1
      %p40 = por %p38, %p39
      %p41 = scmp.ne.s32.totalorder %s30, %s31
      %p42 = scmp.eq.s32.totalorder %s22, 0
      %p43 = por %p41, %p42
      %p44 = scmp.ne.s32.totalorder %s30, %s31
      %p45 = scmp.eq.s32.totalorder %s23, 1
      %p46 = por %p44, %p45
      %p48 = scmp.ne.s32.totalorder %s31, %s47
      %p49 = scmp.eq.s32.totalorder %s23, 0
      %p50 = por %p48, %p49
      %s52 = sadd.s32 %s51, 1
      %p55 = scmp.eq.s32.totalorder %s17, 1
      %p56 = scmp.ne.s32.totalorder %s51, %s53
      %p57 = scmp.eq.s32.totalorder %s17, 0
      %p58 = por %p56, %p57
      %p59 = scmp.ne.s32.totalorder %s51, %s53
      %p60 = scmp.eq.s32.totalorder %s22, 1
      %p61 = por %p59, %p60
      %p62 = scmp.ne.s32.totalorder %s53, %s54
      %p63 = scmp.eq.s32.totalorder %s22, 0
      %p64 = por %p62, %p63
      %p65 = scmp.ne.s32.totalorder %s53, %s54
      %p66 = scmp.eq.s32.totalorder %s23, 1
      %p67 = por %p65, %p66
      %p69 = scmp.ne.s32.totalorder %s54, %s68
      %p70 = scmp.eq.s32.totalorder %s23, 0
      %p71 = por %p69, %p70
      %s73 = sadd.s32 %s72, 1
      %p76 = scmp.eq.s32.totalorder %s17, 1
      %p77 = scmp.ne.s32.totalorder %s72, %s74
      %p78 = scmp.eq.s32.totalorder %s17, 0
      %p79 = por %p77, %p78
      %p80 = scmp.ne.s32.totalorder %s72, %s74
      %p81 = scmp.eq.s32.totalorder %s22, 1
      %p82 = por %p80, %p81
      %p83 = scmp.ne.s32.totalorder %s74, %s75
      %p84 = scmp.eq.s32.totalorder %s22, 0
      %p85 = por %p83, %p84
      %p86 = scmp.ne.s32.totalorder %s74, %s75
      %p87 = scmp.eq.s32.totalorder %s23, 1
      %p88 = por %p86, %p87
      %p90 = scmp.ne.s32.totalorder %s75, %s89
      %p91 = scmp.eq.s32.totalorder %s23, 0
      %p92 = por %p90, %p91
      %s94 = sadd.s32 %s93, 1
      %p97 = scmp.eq.s32.totalorder %s17, 1
      %p98 = scmp.ne.s32.totalorder %s93, %s95
      %p99 = scmp.eq.s32.totalorder %s17, 0
      %p100 = por %p98, %p99
      %p101 = scmp.ne.s32.totalorder %s93, %s95
      %p102 = scmp.eq.s32.totalorder %s22, 1
      %p103 = por %p101, %p102
      %p104 = scmp.ne.s32.totalorder %s95, %s96
      %p105 = scmp.eq.s32.totalorder %s22, 0
      %p106 = por %p104, %p105
      %p107 = scmp.ne.s32.totalorder %s95, %s96
      %p108 = scmp.eq.s32.totalorder %s23, 1
      %p109 = por %p107, %p108
      %p111 = scmp.ne.s32.totalorder %s96, %s110
      %p112 = scmp.eq.s32.totalorder %s23, 0
      %p113 = por %p111, %p112
      %s115 = sadd.s32 %s114, 1
      %p118 = scmp.eq.s32.totalorder %s17, 1
      %p119 = scmp.ne.s32.totalorder %s114, %s116
      %p120 = scmp.eq.s32.totalorder %s17, 0
      %p121 = por %p119, %p120
      %p122 = scmp.ne.s32.totalorder %s114, %s116
      %p123 = scmp.eq.s32.totalorder %s22, 1
      %p124 = por %p122, %p123
      %p125 = scmp.ne.s32.totalorder %s116, %s117
      %p126 = scmp.eq.s32.totalorder %s22, 0
      %p127 = por %p125, %p126
      %p128 = scmp.ne.s32.totalorder %s116, %s117
      %p129 = scmp.eq.s32.totalorder %s23, 1
      %p130 = por %p128, %p129
      %p132 = scmp.ne.s32.totalorder %s117, %s131
      %p133 = scmp.eq.s32.totalorder %s23, 0
      %p134 = por %p132, %p133
      %s135 = ssub.s32 %s17, %s24
      %p136 = scmp.eq.s32.totalorder %s135, 0
      %s138 = sadd.s32 %s137, 1
      %s139 = scalar_select %p136, %s137, %s138
      %p142 = pneg %p136
      %p143 = scmp.eq.s32.totalorder %s17, 1
      %p144 = por %p142, %p143
      %p145 = scmp.ne.s32.totalorder %s137, %s140
      %p146 = scmp.eq.s32.totalorder %s17, 0
      %p147 = por %p145, %p146
      %p148 = scmp.ne.s32.totalorder %s137, %s140
      %p149 = scmp.eq.s32.totalorder %s22, 1
      %p150 = por %p148, %p149
      %p151 = scmp.ne.s32.totalorder %s140, %s141
      %p152 = scmp.eq.s32.totalorder %s22, 0
      %p153 = por %p151, %p152
      %p154 = scmp.ne.s32.totalorder %s140, %s141
      %p155 = scmp.eq.s32.totalorder %s23, 1
      %p156 = por %p154, %p155
      %p158 = scmp.ne.s32.totalorder %s141, %s157
      %p159 = scmp.eq.s32.totalorder %s23, 0
      %p160 = por %p158, %p159
      %s161 = ssub.s32 %s17, %s24
      %p162 = scmp.eq.s32.totalorder %s161, 0
      %s164 = sadd.s32 %s163, 1
      %s165 = scalar_select %p162, %s163, %s164
      %p168 = pneg %p162
      %p169 = scmp.eq.s32.totalorder %s17, 1
      %p170 = por %p168, %p169
      %p171 = scmp.ne.s32.totalorder %s163, %s166
      %p172 = scmp.eq.s32.totalorder %s17, 0
      %p173 = por %p171, %p172
      %p174 = scmp.ne.s32.totalorder %s163, %s166
      %p175 = scmp.eq.s32.totalorder %s22, 1
      %p176 = por %p174, %p175
      %p177 = scmp.ne.s32.totalorder %s166, %s167
      %p178 = scmp.eq.s32.totalorder %s22, 0
      %p179 = por %p177, %p178
      %p180 = scmp.ne.s32.totalorder %s166, %s167
      %p181 = scmp.eq.s32.totalorder %s23, 1
      %p182 = por %p180, %p181
      %p184 = scmp.ne.s32.totalorder %s167, %s183
      %p185 = scmp.eq.s32.totalorder %s23, 0
      %p186 = por %p184, %p185
      %s187 = ssub.s32 %s17, %s24
      %p188 = scmp.eq.s32.totalorder %s187, 0
      %s190 = sadd.s32 %s189, 1
      %s191 = scalar_select %p188, %s189, %s190
      %p194 = pneg %p188
      %p195 = scmp.eq.s32.totalorder %s17, 1
      %p196 = por %p194, %p195
      %p197 = scmp.ne.s32.totalorder %s189, %s192
      %p198 = scmp.eq.s32.totalorder %s17, 0
      %p199 = por %p197, %p198
      %p200 = scmp.ne.s32.totalorder %s189, %s192
      %p201 = scmp.eq.s32.totalorder %s22, 1
      %p202 = por %p200, %p201
      %p203 = scmp.ne.s32.totalorder %s192, %s193
      %p204 = scmp.eq.s32.totalorder %s22, 0
      %p205 = por %p203, %p204
      %p206 = scmp.ne.s32.totalorder %s192, %s193
      %p207 = scmp.eq.s32.totalorder %s23, 1
      %p208 = por %p206, %p207
      %p210 = scmp.ne.s32.totalorder %s193, %s209
      %p211 = scmp.eq.s32.totalorder %s23, 0
      %p212 = por %p210, %p211
      %p213 = scmp.le.s32.totalorder 1, %s17
      %p214 = scmp.lt.s32.totalorder %s17, 3
      %p215 = pnand %p213, %p214
      %p216 = pneg %p215
      // Predicated region
      $region9: #{tpu_custom_call.1} parent=5 // pred_check
        _
      $region10: #{tpu_custom_call.1} parent=5 // pred_check_branch
        %218 = sbr.rel (%p215) target = $region12
      $region11: #{tpu_custom_call.1} parent=5 // pred_region
        %s219 = ssub.s32 %s17, 1
        // Predicated region
        $region13: #{tpu_custom_call.1} parent=11 // pred_check
          %p220 = pneg %p64
        $region14: #{tpu_custom_call.1} parent=11 // pred_check_branch
          %222 = sbr.rel (%p220) target = $region16
        $region15: #{tpu_custom_call.1} parent=11 // pred_region
          _
        $region16: #{tpu_custom_call.1} parent=11 // pred_fallthru
          _
        // Predicated region
        $region17: #{tpu_custom_call.1} parent=11 // pred_check
          %p223 = pneg %p85
        $region18: #{tpu_custom_call.1} parent=11 // pred_check_branch
          %225 = sbr.rel (%p223) target = $region20
        $region19: #{tpu_custom_call.1} parent=11 // pred_region
          _
        $region20: #{tpu_custom_call.1} parent=11 // pred_fallthru
          _
        // Predicated region
        $region21: #{tpu_custom_call.1} parent=11 // pred_check
          %p226 = pneg %p106
        $region22: #{tpu_custom_call.1} parent=11 // pred_check_branch
          %228 = sbr.rel (%p226) target = $region24
        $region23: #{tpu_custom_call.1} parent=11 // pred_region
          _
        $region24: #{tpu_custom_call.1} parent=11 // pred_fallthru
          _
        // Predicated region
        $region25: #{tpu_custom_call.1} parent=11 // pred_check
          %p229 = pneg %p127
        $region26: #{tpu_custom_call.1} parent=11 // pred_check_branch
          %231 = sbr.rel (%p229) target = $region28
        $region27: #{tpu_custom_call.1} parent=11 // pred_region
          _
        $region28: #{tpu_custom_call.1} parent=11 // pred_fallthru
          _
      $region12: #{tpu_custom_call.1} parent=5 // pred_fallthru
        _
      %p232 = scmp.lt.s32.totalorder %s17, 2
      // Predicated region
      $region29: #{tpu_custom_call.1} parent=5 // pred_check
        %p233 = pneg %p232
      $region30: #{tpu_custom_call.1} parent=5 // pred_check_branch
        %235 = sbr.rel (%p233) target = $region32
      $region31: #{tpu_custom_call.1} parent=5 // pred_region
        // Predicated region
        $region33: #{tpu_custom_call.1} parent=31 // pred_check
          %p236 = pneg %p37
        $region34: #{tpu_custom_call.1} parent=31 // pred_check_branch
          %238 = sbr.rel (%p236) target = $region36
        $region35: #{tpu_custom_call.1} parent=31 // pred_region
          %p239 = scmp.lt.s32.totalorder %s17, 1
          %s240 = scalar_select %p239, %s17, 1
          %s241 = smul.addr %s240, 2
          %s242 = smul.addr %s241, 4
          %s243 = scalar_lea.vmem %s0, %s242
        $region36: #{tpu_custom_call.1} parent=31 // pred_fallthru
          _
      $region32: #{tpu_custom_call.1} parent=5 // pred_fallthru
        _
      %p244 = scmp.le.s32.totalorder 1, %s17
      %p245 = scmp.lt.s32.totalorder %s17, 3
      %p246 = pnand %p244, %p245
      %p247 = pneg %p246
      // Predicated region
      $region37: #{tpu_custom_call.1} parent=5 // pred_check
        _
      $region38: #{tpu_custom_call.1} parent=5 // pred_check_branch
        %249 = sbr.rel (%p246) target = $region40
      $region39: #{tpu_custom_call.1} parent=5 // pred_region
        %s250 = ssub.s32 %s17, 1
        %p251 = scmp.lt.s32.totalorder %s22, 1
        %s252 = scalar_select %p251, %s22, 1
        %s253 = smul.addr %s252, 2
        %s254 = smul.addr %s253, 4
        %s255 = scalar_lea.vmem %s0, %s254
        %p256 = pneg %p43
        %p257 = pneg %p40
        %p258 = pneg %p64
        %p259 = pneg %p61
        %p260 = pneg %p85
        %p261 = pneg %p82
        %p262 = pneg %p106
        %p263 = pneg %p103
        %p264 = pneg %p127
        %p265 = pneg %p124
        %p266 = pneg %p153
        %p267 = pneg %p150
        %s268 = sand.u32 %s140, 1
        %s269 = scalar_lea.sflag [#allocation4], %s268
        %s270 = sand.u32 %s140, 1
        %s271 = smul.addr %s270, 16
        %s272 = scalar_lea.vmem [#allocation3], %s271
        %p273 = pneg %p179
        %p274 = pneg %p176
        %p275 = scmp.lt.s32.totalorder %s22, 1
        %s276 = scalar_select %p275, %s22, 1
        %s277 = smul.addr %s276, 8
        %s278 = scalar_lea.vmem %s6, %s277
        %p279 = pneg %p205
        %p280 = pneg %p202
        %p281 = scmp.lt.s32.totalorder %s22, 1
        %s282 = scalar_select %p281, %s22, 1
        %s283 = smul.addr %s282, 8
        %s284 = scalar_lea.vmem %s7, %s283
        %p285 = scmp.lt.s32.totalorder %s22, 1
        %s286 = scalar_select %p285, %s22, 1
        %s287 = smul.addr %s286, 2
        %s288 = smul.addr %s287, 4
        %s289 = scalar_lea.vmem %s0, %s288
        %p290 = scmp.lt.s32.totalorder %s22, 1
        %s291 = scalar_select %p290, %s22, 1
        %s292 = smul.addr %s291, 8
        %s293 = scalar_lea.vmem %s6, %s292
        %p294 = scmp.lt.s32.totalorder %s22, 1
        %s295 = scalar_select %p294, %s22, 1
        %s296 = smul.addr %s295, 8
        %s297 = scalar_lea.vmem %s7, %s296
        %v298 = vld [vmem:[%s289] sm:$0xff]
        %299 = vst [vmem:[#allocation2] sm:$0xff] %v298
        %vm300 = vcmask 273408
        %301 = vst.msk [vmem:[#allocation2 + $0x8] sm:$0xf] %vm300, 0.0
        %v302 = vld [vmem:[%s1] sm:$0xf]
        %v303 = vld [vmem:[#allocation2] sm:$0xff]
        %305 = vset.pattern.permute.xlu0 0
        %306 = vperm.xlu0 %305, %v302
        %v307 = vpop.permute.xlu0 %306
        %v309 = vunpack.c.l.s4 839922192
        %v310 = vunpack.c.0.s8 %v309
        %v311 = vlaneseq
        %v312 = vshrl.u32 %v311, 7
        %v313 = vsub.s32 %v310, %v312
        %v314 = vrot.slane %v307, %v313
        %v316 = vmul.f32 %v303, %v314
        %v317 = vadd.f32 %v316, 0.0
        %s318 = scalar_lea.vmem %s1, 4
        %v319 = vld [vmem:[%s318] sm:$0xf]
        %v320 = vld [vmem:[#allocation2] sm:$0xff]
        %v321 = vld [vmem:[#allocation2 + $0x8] sm:$0xf]
        %323 = vset.pattern.permute.xlu0 0
        %324 = vperm.xlu0 %323, %v319
        %v325 = vpop.permute.xlu0 %324
        %v327 = vunpack.c.l.s4 839922192
        %v328 = vunpack.c.0.s8 %v327
        %v329 = vlaneseq
        %v330 = vshrl.u32 %v329, 7
        %v331 = vsub.s32 %v328, %v330
        %v332 = vrot.slane %v325, %v331
        %v334 = vmul.f32 %v320, %v332
        %v335 = vmul.f32 %v321, %v332
        %338 = vrot.lane.b32.xlu0 %v334, 127
        %v339 = vpop.permute.xlu0 %338
        %340 = vrot.lane.b32.xlu0 %v335, 127
        %v341 = vpop.permute.xlu0 %340
        %v342 = vrot.slane %v339, 4
        %v343 = vrot.slane %v341, 4
        %vm344 = vcmask 1043456
        %v345 = vsel %vm344, %v342, %v343
        %vm346 = vcmask 1039360
        %v347 = vsel %vm346, %v339, %v345
        %v349 = vadd.f32 %v317, %v347
        %s350 = scalar_lea.vmem %s1, 8
        %v351 = vld [vmem:[%s350] sm:$0xf]
        %353 = vset.pattern.permute.xlu0 0
        %354 = vperm.xlu0 %353, %v351
        %v355 = vpop.permute.xlu0 %354
        %v357 = vunpack.c.l.s4 839922192
        %v358 = vunpack.c.0.s8 %v357
        %v359 = vlaneseq
        %v360 = vshrl.u32 %v359, 7
        %v361 = vsub.s32 %v358, %v360
        %v362 = vrot.slane %v355, %v361
        %v364 = vmul.f32 %v320, %v362
        %v365 = vmul.f32 %v321, %v362
        %368 = vrot.lane.b32.xlu0 %v364, 126
        %v369 = vpop.permute.xlu0 %368
        %370 = vrot.lane.b32.xlu0 %v365, 126
        %v371 = vpop.permute.xlu0 %370
        %v372 = vrot.slane %v369, 4
        %v373 = vrot.slane %v371, 4
        %v374 = vsel %vm344, %v372, %v373
        %vm375 = vcmask 1031168
        %v376 = vsel %vm375, %v369, %v374
        %v378 = vadd.f32 %v349, %v376
        %s379 = scalar_lea.vmem %s1, 12
        %v380 = vld [vmem:[%s379] sm:$0xf]
        %382 = vset.pattern.permute.xlu0 0
        %383 = vperm.xlu0 %382, %v380
        %v384 = vpop.permute.xlu0 %383
        %v386 = vunpack.c.l.s4 839922192
        %v387 = vunpack.c.0.s8 %v386
        %v388 = vlaneseq
        %v389 = vshrl.u32 %v388, 7
        %v390 = vsub.s32 %v387, %v389
        %v391 = vrot.slane %v384, %v390
        %v393 = vmul.f32 %v320, %v391
        %v394 = vmul.f32 %v321, %v391
        %397 = vrot.lane.b32.xlu0 %v393, 112
        %v398 = vpop.permute.xlu0 %397
        %399 = vrot.lane.b32.xlu0 %v394, 112
        %v400 = vpop.permute.xlu0 %399
        %v401 = vrot.slane %v398, 4
        %v402 = vrot.slane %v400, 4
        %v403 = vsel %vm344, %v401, %v402
        %vm404 = vcmask 916480
        %v405 = vsel %vm404, %v398, %v403
        %v407 = vadd.f32 %v378, %v405
        %s408 = scalar_lea.vmem %s1, 16
        %v409 = vld [vmem:[%s408] sm:$0xf]
        %411 = vset.pattern.permute.xlu0 0
        %412 = vperm.xlu0 %411, %v409
        %v413 = vpop.permute.xlu0 %412
        %v415 = vunpack.c.l.s4 839922192
        %v416 = vunpack.c.0.s8 %v415
        %v417 = vlaneseq
        %v418 = vshrl.u32 %v417, 7
        %v419 = vsub.s32 %v416, %v418
        %v420 = vrot.slane %v413, %v419
        %v422 = vmul.f32 %v320, %v420
        %v423 = vmul.f32 %v321, %v420
        %426 = vrot.lane.b32.xlu0 %v422, 111
        %v427 = vpop.permute.xlu0 %426
        %428 = vrot.lane.b32.xlu0 %v423, 111
        %v429 = vpop.permute.xlu0 %428
        %v430 = vrot.slane %v427, 4
        %v431 = vrot.slane %v429, 4
        %v432 = vsel %vm344, %v430, %v431
        %vm433 = vcmask 908288
        %v434 = vsel %vm433, %v427, %v432
        %v436 = vadd.f32 %v407, %v434
        %s437 = scalar_lea.vmem %s1, 20
        %v438 = vld [vmem:[%s437] sm:$0xf]
        %440 = vset.pattern.permute.xlu0 0
        %441 = vperm.xlu0 %440, %v438
        %v442 = vpop.permute.xlu0 %441
        %v444 = vunpack.c.l.s4 839922192
        %v445 = vunpack.c.0.s8 %v444
        %v446 = vlaneseq
        %v447 = vshrl.u32 %v446, 7
        %v448 = vsub.s32 %v445, %v447
        %v449 = vrot.slane %v442, %v448
        %v451 = vmul.f32 %v320, %v449
        %v452 = vmul.f32 %v321, %v449
        %455 = vrot.lane.b32.xlu0 %v451, 110
        %v456 = vpop.permute.xlu0 %455
        %457 = vrot.lane.b32.xlu0 %v452, 110
        %v458 = vpop.permute.xlu0 %457
        %v459 = vrot.slane %v456, 4
        %v460 = vrot.slane %v458, 4
        %v461 = vsel %vm344, %v459, %v460
        %vm462 = vcmask 900096
        %v463 = vsel %vm462, %v456, %v461
        %v465 = vadd.f32 %v436, %v463
        %s466 = scalar_lea.vmem %s1, 24
        %v467 = vld [vmem:[%s466] sm:$0xf]
        %469 = vset.pattern.permute.xlu0 0
        %470 = vperm.xlu0 %469, %v467
        %v471 = vpop.permute.xlu0 %470
        %v473 = vunpack.c.l.s4 839922192
        %v474 = vunpack.c.0.s8 %v473
        %v475 = vlaneseq
        %v476 = vshrl.u32 %v475, 7
        %v477 = vsub.s32 %v474, %v476
        %v478 = vrot.slane %v471, %v477
        %v480 = vmul.f32 %v320, %v478
        %v481 = vmul.f32 %v321, %v478
        %484 = vrot.lane.b32.xlu0 %v480, 96
        %v485 = vpop.permute.xlu0 %484
        %486 = vrot.lane.b32.xlu0 %v481, 96
        %v487 = vpop.permute.xlu0 %486
        %v488 = vrot.slane %v485, 4
        %v489 = vrot.slane %v487, 4
        %v490 = vsel %vm344, %v488, %v489
        %vm491 = vcmask 785408
        %v492 = vsel %vm491, %v485, %v490
        %v494 = vadd.f32 %v465, %v492
        %s495 = scalar_lea.vmem %s1, 28
        %v496 = vld [vmem:[%s495] sm:$0xf]
        %498 = vset.pattern.permute.xlu0 0
        %499 = vperm.xlu0 %498, %v496
        %v500 = vpop.permute.xlu0 %499
        %v502 = vunpack.c.l.s4 839922192
        %v503 = vunpack.c.0.s8 %v502
        %v504 = vlaneseq
        %v505 = vshrl.u32 %v504, 7
        %v506 = vsub.s32 %v503, %v505
        %v507 = vrot.slane %v500, %v506
        %v509 = vmul.f32 %v320, %v507
        %v510 = vmul.f32 %v321, %v507
        %513 = vrot.lane.b32.xlu0 %v509, 95
        %v514 = vpop.permute.xlu0 %513
        %515 = vrot.lane.b32.xlu0 %v510, 95
        %v516 = vpop.permute.xlu0 %515
        %v517 = vrot.slane %v514, 4
        %v518 = vrot.slane %v516, 4
        %v519 = vsel %vm344, %v517, %v518
        %vm520 = vcmask 777216
        %v521 = vsel %vm520, %v514, %v519
        %v523 = vadd.f32 %v494, %v521
        %s524 = scalar_lea.vmem %s1, 32
        %v525 = vld [vmem:[%s524] sm:$0xf]
        %527 = vset.pattern.permute.xlu0 0
        %528 = vperm.xlu0 %527, %v525
        %v529 = vpop.permute.xlu0 %528
        %v531 = vunpack.c.l.s4 839922192
        %v532 = vunpack.c.0.s8 %v531
        %v533 = vlaneseq
        %v534 = vshrl.u32 %v533, 7
        %v535 = vsub.s32 %v532, %v534
        %v536 = vrot.slane %v529, %v535
        %v538 = vmul.f32 %v320, %v536
        %v539 = vmul.f32 %v321, %v536
        %542 = vrot.lane.b32.xlu0 %v538, 94
        %v543 = vpop.permute.xlu0 %542
        %544 = vrot.lane.b32.xlu0 %v539, 94
        %v545 = vpop.permute.xlu0 %544
        %v546 = vrot.slane %v543, 4
        %v547 = vrot.slane %v545, 4
        %v548 = vsel %vm344, %v546, %v547
        %vm549 = vcmask 769024
        %v550 = vsel %vm549, %v543, %v548
        %v552 = vadd.f32 %v523, %v550
        %v553 = vld [vmem:[%s2] sm:$0xff]
        %v554 = vld [vmem:[%s3] sm:$0xff]
        %556 = vset.pattern.permute.xlu0 0
        %557 = vperm.xlu0 %556, %v554
        %v558 = vpop.permute.xlu0 %557
        %v561 = vcombine.high %v552, %v552
        %vm562 = vcmask 31744
        %v564 = vsel %vm562, %v553, 0
        %v566 = vsel %vm344, %v552, 0
        %v568 = vsel %vm344, %v561, 0
        %570 = vmatprep.subr.mxu0 0.0
        %571 = vmatpush1.msra.mxu0 0.0
        %572 = vmatprep.subr.mxu0 0.0
        %573 = vmatpush1.msra.mxu0 0.0
        %574 = vmatprep.subr.mxu0 0.0
        %575 = vmatpush1.msra.mxu0 0.0
        %576 = vmatprep.subr.mxu0 0.0
        %577 = vmatpush1.msra.mxu0 0.0
        %578 = vmatprep.subr.mxu0 0.0
        %579 = vmatpush1.msra.mxu0 0.0
        %580 = vmatprep.subr.mxu0 0.0
        %581 = vmatpush1.msra.mxu0 0.0
        %582 = vmatprep.subr.mxu0 0.0
        %583 = vmatpush1.msra.mxu0 0.0
        %584 = vmatprep.subr.mxu0 0.0
        %585 = vmatpush1.msra.mxu0 0.0
        %586 = vmatprep.subr.mxu0 0.0
        %587 = vmatpush1.msra.mxu0 0.0
        %588 = vmatprep.subr.mxu0 0.0
        %589 = vmatpush1.msra.mxu0 0.0
        %590 = vmatprep.subr.mxu0 0.0
        %591 = vmatpush1.msra.mxu0 0.0
        %592 = vmatprep.subr.mxu0 0.0
        %593 = vmatpush1.msra.mxu0 0.0
        %594 = vmatprep.subr.mxu0 0.0
        %595 = vmatpush1.msra.mxu0 0.0
        %596 = vmatprep.subr.mxu0 0.0
        %597 = vmatpush1.msra.mxu0 0.0
        %598 = vmatprep.subr.mxu0 0.0
        %599 = vmatpush1.msra.mxu0 0.0
        %600 = vmatprep.subr.mxu0 %v568
        %601 = vmatpush1.msra.mxu0 %v566
        %602 = vmatprep.subr.mxu0 0.0
        %603 = vmatpush2.msra.mxu0 0.0
        %604 = vmatprep.subr.mxu0 0.0
        %605 = vmatpush2.msra.mxu0 0.0
        %606 = vmatprep.subr.mxu0 0.0
        %607 = vmatpush2.msra.mxu0 0.0
        %608 = vmatprep.subr.mxu0 0.0
        %609 = vmatpush2.msra.mxu0 0.0
        %610 = vmatprep.subr.mxu0 0.0
        %611 = vmatpush2.msra.mxu0 0.0
        %612 = vmatprep.subr.mxu0 0.0
        %613 = vmatpush2.msra.mxu0 0.0
        %614 = vmatprep.subr.mxu0 0.0
        %615 = vmatpush2.msra.mxu0 0.0
        %616 = vmatprep.subr.mxu0 0.0
        %617 = vmatpush2.msra.mxu0 0.0
        %618 = vmatprep.subr.mxu0 0.0
        %619 = vmatpush2.msra.mxu0 0.0
        %620 = vmatprep.subr.mxu0 0.0
        %621 = vmatpush2.msra.mxu0 0.0
        %622 = vmatprep.subr.mxu0 0.0
        %623 = vmatpush2.msra.mxu0 0.0
        %624 = vmatprep.subr.mxu0 0.0
        %625 = vmatpush2.msra.mxu0 0.0
        %626 = vmatprep.subr.mxu0 0.0
        %627 = vmatpush2.msra.mxu0 0.0
        %628 = vmatprep.subr.mxu0 0.0
        %629 = vmatpush2.msra.mxu0 0.0
        %630 = vmatprep.subr.mxu0 0.0
        %631 = vmatpush2.msra.mxu0 0.0
        %632 = vmatprep.subr.mxu0 0.0
        %633 = vmatpush2.msra.mxu0 0.0
        %634 = vmatprep.mubr.f32.mxu0 0.0
        %635 = vmatmul.mubr.f32.gmra.mxu0 %v564
        %v636 = vpop.f32.mrf.mxu0
        %v637 = vadd.f32 %v558, %v636
        %v638 = vpop.f32.mrf.mxu0
        %v639 = vadd.f32 %v558, %v638
        %640 = vdwg.mxu0
        %v641 = vmax.f32 %v637, 0.0
        %v642 = vmax.f32 %v639, 0.0
        %v643 = vld [vmem:[%s4] sm:$0x3]
        %v645 = vlaneseq
        %v646 = vshrl.u32 %v645, 7
        %v647 = vsub.s32 0, %v646
        %v648 = vrot.slane %v643, %v647
        %v649 = vlaneseq
        %v650 = vshrl.u32 %v649, 7
        %v651 = vsub.s32 1, %v650
        %v652 = vrot.slane %v643, %v651
        %v655 = vmul.f32 %v641, %v648
        %v656 = vmul.f32 %v642, %v652
        %v657 = vadd.f32 %v655, %v656
        %658 = vadd.xlane.f32.xlu0 %v657
        %v659 = vpop.xlane.xlu0 %658
        %vm660 = vcmask 7168
        %661 = vst.msk [vmem:[%s293] sm:$0xff] %vm660, %v659
        %v662 = vmul.f32 %v655, %v655
        %v663 = vmul.f32 %v656, %v656
        %v664 = vadd.f32 %v662, %v663
        %665 = vadd.xlane.f32.xlu0 %v664
        %v666 = vpop.xlane.xlu0 %665
        %667 = vst.msk [vmem:[%s297] sm:$0xff] %vm660, %v666
        %vm668 = vcmask 113664
        %669 = vst.msk [vmem:[%s272] sm:$0xff] %vm668, %v641
        %671 = vrot.lane.b32.xlu0 %v641, 126
        %v672 = vpop.permute.xlu0 %671
        %vm674 = vcmask 228464
        %675 = vst.msk [vmem:[%s272] sm:$0xff] %vm674, %v672
        %676 = vrot.lane.b32.xlu0 %v641, 124
        %v677 = vpop.permute.xlu0 %676
        %vm679 = vcmask 343264
        %680 = vst.msk [vmem:[%s272] sm:$0xff] %vm679, %v677
        %681 = vrot.lane.b32.xlu0 %v641, 122
        %v682 = vpop.permute.xlu0 %681
        %vm684 = vcmask 458064
        %685 = vst.msk [vmem:[%s272] sm:$0xff] %vm684, %v682
        %686 = vrot.lane.b32.xlu0 %v641, 120
        %v687 = vpop.permute.xlu0 %686
        %vm689 = vcmask 572864
        %690 = vst.msk [vmem:[%s272] sm:$0xff] %vm689, %v687
        %691 = vrot.lane.b32.xlu0 %v641, 118
        %v692 = vpop.permute.xlu0 %691
        %vm694 = vcmask 687664
        %695 = vst.msk [vmem:[%s272] sm:$0xff] %vm694, %v692
        %696 = vrot.lane.b32.xlu0 %v641, 116
        %v697 = vpop.permute.xlu0 %696
        %vm699 = vcmask 802464
        %700 = vst.msk [vmem:[%s272] sm:$0xff] %vm699, %v697
        %701 = vrot.lane.b32.xlu0 %v641, 114
        %v702 = vpop.permute.xlu0 %701
        %vm704 = vcmask 917264
        %705 = vst.msk [vmem:[%s272] sm:$0xff] %vm704, %v702
        %707 = vrot.lane.b32.xlu0 %v642, 112
        %v708 = vpop.permute.xlu0 %707
        %vm710 = vcmask 1032064
        %711 = vst.msk [vmem:[%s272] sm:$0xff] %vm710, %v708
        %712 = vrot.lane.b32.xlu0 %v642, 110
        %v713 = vpop.permute.xlu0 %712
        %vm715 = vcmask 1048560
        %716 = vst.msk [vmem:[%s272] sm:$0xff] %vm715, %v713
        %vm717 = vcmask 97280
        %718 = vst.msk [vmem:[%s272 + $0x8] sm:$0xff] %vm717, %v713
        %719 = vrot.lane.b32.xlu0 %v642, 108
        %v720 = vpop.permute.xlu0 %719
        %vm722 = vcmask 212064
        %723 = vst.msk [vmem:[%s272 + $0x8] sm:$0xff] %vm722, %v720
        %724 = vrot.lane.b32.xlu0 %v642, 106
        %v725 = vpop.permute.xlu0 %724
        %vm727 = vcmask 326864
        %728 = vst.msk [vmem:[%s272 + $0x8] sm:$0xff] %vm727, %v725
        %729 = vrot.lane.b32.xlu0 %v642, 104
        %v730 = vpop.permute.xlu0 %729
        %vm732 = vcmask 441664
        %733 = vst.msk [vmem:[%s272 + $0x8] sm:$0xff] %vm732, %v730
        %734 = vrot.lane.b32.xlu0 %v642, 102
        %v735 = vpop.permute.xlu0 %734
        %vm737 = vcmask 556464
        %738 = vst.msk [vmem:[%s272 + $0x8] sm:$0xff] %vm737, %v735
        %s739 = sand.u32 %s140, 1
        %s740 = scalar_lea.sflag [#allocation4], %s739
        %s741 = sand.u32 %s140, 1
        %s742 = smul.addr %s741, 16
        %s743 = scalar_lea.vmem [#allocation3], %s742
        %p744 = scmp.lt.s32.totalorder %s22, 1
        %s745 = scalar_select %p744, %s22, 1
        %s746 = smul.addr %s745, 8
        %s747 = scalar_lea.vmem %s6, %s746
        %p748 = scmp.lt.s32.totalorder %s22, 1
        %s749 = scalar_select %p748, %s22, 1
        %s750 = smul.addr %s749, 8
        %s751 = scalar_lea.vmem %s7, %s750
        // Predicated region
        $region41: #{tpu_custom_call.1} parent=39 // pred_check
          %p752 = pneg %p150
        $region42: #{tpu_custom_call.1} parent=39 // pred_check_branch
          %754 = sbr.rel (%p752) target = $region44
        $region43: #{tpu_custom_call.1} parent=39 // pred_region
          %s756 = ssub.s32 256, 256
          %757 = vsyncadd %s740, %s756
          %s758 = smul.addr %s22, 2
          %s759 = smul.addr %s758, 128
          %s760 = scalar_lea.hbm %s5, %s759
          %s762 = sshll.u32 %s743, 4
          %s763 = int_to_ptr.vmem [resolvable:$true] %s762
          %765 = dma.vmem_to_hbm [thread:$0]  %s763, 256, %s760, %s740
        $region44: #{tpu_custom_call.1} parent=39 // pred_fallthru
          _
        // Predicated region
        $region45: #{tpu_custom_call.1} parent=39 // pred_check
          %p766 = pneg %p176
        $region46: #{tpu_custom_call.1} parent=39 // pred_check_branch
          %768 = sbr.rel (%p766) target = $region48
        $region47: #{tpu_custom_call.1} parent=39 // pred_region
          _
        $region48: #{tpu_custom_call.1} parent=39 // pred_fallthru
          _
        // Predicated region
        $region49: #{tpu_custom_call.1} parent=39 // pred_check
          %p769 = pneg %p202
        $region50: #{tpu_custom_call.1} parent=39 // pred_check_branch
          %771 = sbr.rel (%p769) target = $region52
        $region51: #{tpu_custom_call.1} parent=39 // pred_region
          _
        $region52: #{tpu_custom_call.1} parent=39 // pred_fallthru
          _
      $region40: #{tpu_custom_call.1} parent=5 // pred_fallthru
        _
      %p772 = scmp.le.s32.totalorder 2, %s17
      // Predicated region
      $region53: #{tpu_custom_call.1} parent=5 // pred_check
        %p773 = pneg %p772
      $region54: #{tpu_custom_call.1} parent=5 // pred_check_branch
        %775 = sbr.rel (%p773) target = $region56
      $region55: #{tpu_custom_call.1} parent=5 // pred_region
        %s776 = ssub.s32 %s17, 2
        // Predicated region
        $region57: #{tpu_custom_call.1} parent=55 // pred_check
          %p777 = pneg %p156
        $region58: #{tpu_custom_call.1} parent=55 // pred_check_branch
          %779 = sbr.rel (%p777) target = $region60
        $region59: #{tpu_custom_call.1} parent=55 // pred_region
          %s780 = sand.u32 %s141, 1
          %s781 = scalar_lea.sflag [#allocation4], %s780
          %s782 = sand.u32 %s141, 1
          %s783 = smul.addr %s782, 16
          %s784 = scalar_lea.vmem [#allocation3], %s783
          %785 = dma.done %s781, 256
        $region60: #{tpu_custom_call.1} parent=55 // pred_fallthru
          _
        // Predicated region
        $region61: #{tpu_custom_call.1} parent=55 // pred_check
          %p786 = pneg %p182
        $region62: #{tpu_custom_call.1} parent=55 // pred_check_branch
          %788 = sbr.rel (%p786) target = $region64
        $region63: #{tpu_custom_call.1} parent=55 // pred_region
          %p789 = scmp.lt.s32.totalorder %s23, 1
          %s790 = scalar_select %p789, %s23, 1
          %s791 = smul.addr %s790, 8
          %s792 = scalar_lea.vmem %s6, %s791
        $region64: #{tpu_custom_call.1} parent=55 // pred_fallthru
          _
        // Predicated region
        $region65: #{tpu_custom_call.1} parent=55 // pred_check
          %p793 = pneg %p208
        $region66: #{tpu_custom_call.1} parent=55 // pred_check_branch
          %795 = sbr.rel (%p793) target = $region68
        $region67: #{tpu_custom_call.1} parent=55 // pred_region
          %p796 = scmp.lt.s32.totalorder %s23, 1
          %s797 = scalar_select %p796, %s23, 1
          %s798 = smul.addr %s797, 8
          %s799 = scalar_lea.vmem %s7, %s798
        $region68: #{tpu_custom_call.1} parent=55 // pred_fallthru
          _
      $region56: #{tpu_custom_call.1} parent=5 // pred_fallthru
        _
    $region6: #{tpu_custom_call.1} parent=1 // loop_footer
      %s21 = sadd.s32 1, %s17
    $region7: #{tpu_custom_call.1} parent=1 // loop_footer_branch
      %16 = sbr.rel target = $region3
    $region8: #{tpu_custom_call.1} parent=1 // loop_exit
      _
    %800 = vsyncpa [#allocation4], 1
    %s801 = scalar_lea.sflag [#allocation4], 1
    %802 = vsyncpa %s801, 1

</llo_original>
